<compile_context>
chip_gen: v7x
topology: tpu7x:2x2x1
jax: 0.10.0
libtpu: 0.0.40
codegen_flags: <defaults>
</compile_context>

<pallas_src>
import functools

import jax
import jax.numpy as jnp
from jax.experimental import pallas as pl
from jax.experimental.pallas import tpu as pltpu

EPS = 1e-7        # Normalize(2) epsilon used by the reference implementation.
_LANE = 128       # lane width
_SUBLANE = 8      # sublane width
_ROW_TILE = 512   # row tile for the sampled (row-major) path
_HW_TILE = 1024   # spatial-lane tile for the num_patches==0 (channel-major) path


def _round_up(x, m):
    return ((x + m - 1) // m) * m


def _pick_row_tile(n):
    """Row tile: <= _ROW_TILE, sublane-aligned, and <= ceil(n/2) so the
    'parallel' grid axis has >= 2 steps (both v7x TensorCores get work)."""
    n8 = _round_up(max(n, 1), _SUBLANE)
    if n8 <= _SUBLANE:
        return _SUBLANE
    half = _round_up(-(-n8 // 2), _SUBLANE)
    return max(_SUBLANE, min(_ROW_TILE, half))


# ---------------------------------------------------------------------------
# Kernels
# ---------------------------------------------------------------------------
def _mlp_l2norm_rows_kernel(x_ref, w1_ref, b1_ref, w2_ref, b2_ref, o_ref, *,
                            compute_dtype):
    # Row-major (sampled) path.
    # x: (TM, Cin_p) bf16   w1: (Cin_p, NCp) bf16   b1: (1, NCp) f32
    # w2: (NCp, NCp) bf16   b2: (1, NCp) f32        o: (TM, NCp)
    x = x_ref[...].astype(compute_dtype)
    h = jnp.dot(x, w1_ref[...],
                preferred_element_type=jnp.float32) + b1_ref[...]
    h = jnp.maximum(h, 0.0)                                   # ReLU (f32 VPU)
    y = jnp.dot(h.astype(compute_dtype), w2_ref[...],
                preferred_element_type=jnp.float32) + b2_ref[...]
    # l2 norm along the channel (lane) dim; padded lanes are exactly zero.
    norm = jnp.sqrt(jnp.sum(y * y, axis=-1, keepdims=True))
    o_ref[...] = (y * pl.reciprocal(norm + EPS, approx=True)).astype(o_ref.dtype)


def _mlp_l2norm_cmajor_kernel(x_ref, w1t_ref, b1t_ref, w2t_ref, b2t_ref,
                              o_ref, *, nc, compute_dtype):
    # Channel-major (num_patches==0, NCHW) path: y = W2^T relu(W1^T x + b1) + b2.
    # x: (Cin, THW)   w1t: (NCp, Cin) bf16   b1t: (NCp, 1) f32
    # w2t: (NCp, NCp) bf16   b2t: (NCp, 1) f32   o: (nc, THW)
    x = x_ref[...].astype(compute_dtype)
    h = jnp.dot(w1t_ref[...], x,
                preferred_element_type=jnp.float32) + b1t_ref[...]
    h = jnp.maximum(h, 0.0)
    y = jnp.dot(w2t_ref[...], h.astype(compute_dtype),
                preferred_element_type=jnp.float32) + b2t_ref[...]
    # l2 norm along the channel (sublane) dim; padded channels are zero.
    norm = jnp.sqrt(jnp.sum(y * y, axis=0, keepdims=True))
    y = y * pl.reciprocal(norm + EPS, approx=True)
    o_ref[...] = y[:nc, :].astype(o_ref.dtype)


def _l2norm_rows_kernel(x_ref, o_ref):
    # use_mlp=False, sampled path: exact f32 divide (matches f32 reference).
    x = x_ref[...].astype(jnp.float32)
    norm = jnp.sqrt(jnp.sum(x * x, axis=-1, keepdims=True))
    o_ref[...] = (x / (norm + EPS)).astype(o_ref.dtype)


def _l2norm_cmajor_kernel(x_ref, o_ref):
    # use_mlp=False, num_patches==0 path: channel dim is the sublane axis.
    x = x_ref[...].astype(jnp.float32)
    norm = jnp.sqrt(jnp.sum(x * x, axis=0, keepdims=True))
    o_ref[...] = (x / (norm + EPS)).astype(o_ref.dtype)


# ---------------------------------------------------------------------------
# pallas_call wrappers
# ---------------------------------------------------------------------------
def _run_mlp_rows(x, prep, *, compute_dtype, out_dtype):
    """Sampled path: x (n, Cin) rows -> (n, nc) normalized MLP features."""
    n, cin = x.shape
    assert cin == prep["cin"], (cin, prep["cin"])
    cin_p, ncp, nc = prep["cin_p"], prep["ncp"], prep["nc"]
    w1, b1, w2, b2 = prep["rm"]

    # Pad the contracting dim to a lane multiple and cast the (tiny) gathered
    # activations to the MXU dtype here, where they are already materialized.
    x = jnp.pad(x, ((0, 0), (0, cin_p - cin))).astype(compute_dtype)

    tm = _pick_row_tile(n)
    n_pad = _round_up(n, tm)
    if n_pad != n:                              # tiny (B*P rows) -> cheap pad
        x = jnp.pad(x, ((0, n_pad - n), (0, 0)))

    out = pl.pallas_call(
        functools.partial(_mlp_l2norm_rows_kernel, compute_dtype=compute_dtype),
        out_shape=jax.ShapeDtypeStruct((n_pad, ncp), out_dtype),
        grid=(n_pad // tm,),
        in_specs=[
            pl.BlockSpec((tm, cin_p), lambda i: (i, 0)),    # activations (tiled)
            pl.BlockSpec((cin_p, ncp), lambda i: (0, 0)),   # weights VMEM-resident
            pl.BlockSpec((1, ncp), lambda i: (0, 0)),
            pl.BlockSpec((ncp, ncp), lambda i: (0, 0)),
            pl.BlockSpec((1, ncp), lambda i: (0, 0)),
        ],
        out_specs=pl.BlockSpec((tm, ncp), lambda i: (i, 0)),
        compiler_params=pltpu.CompilerParams(
            dimension_semantics=("parallel",)),
    )(x, w1, b1, w2, b2)
    return out[:n, :nc]


def _run_mlp_cmajor(feat_flat, prep, *, compute_dtype, out_dtype):
    """num_patches==0 path: feat_flat (B, Cin, HW) -> (B, nc, HW), no transposes."""
    B, cin, hw = feat_flat.shape
    assert cin == prep["cin"], (cin, prep["cin"])
    ncp, nc = prep["ncp"], prep["nc"]
    w1t, b1t, w2t, b2t = prep["cm"]

    thw = hw if hw <= _HW_TILE else _HW_TILE     # trailing ragged tile is masked
    grid = (B, pl.cdiv(hw, thw))

    out = pl.pallas_call(
        functools.partial(_mlp_l2norm_cmajor_kernel, nc=nc,
                          compute_dtype=compute_dtype),
        out_shape=jax.ShapeDtypeStruct((B, nc, hw), out_dtype),
        grid=grid,
        in_specs=[
            pl.BlockSpec((None, cin, thw), lambda b, j: (b, 0, j)),
            pl.BlockSpec((ncp, cin), lambda b, j: (0, 0)),   # W1^T resident
            pl.BlockSpec((ncp, 1), lambda b, j: (0, 0)),
            pl.BlockSpec((ncp, ncp), lambda b, j: (0, 0)),   # W2^T resident
            pl.BlockSpec((ncp, 1), lambda b, j: (0, 0)),
        ],
        out_specs=pl.BlockSpec((None, nc, thw), lambda b, j: (b, 0, j)),
        compiler_params=pltpu.CompilerParams(
            dimension_semantics=("parallel", "parallel")),
    )(feat_flat, w1t, b1t, w2t, b2t)
    return out


def _run_l2norm_rows(x, *, out_dtype):
    n, c = x.shape
    tm = _pick_row_tile(n)
    n_pad = _round_up(n, tm)
    if n_pad != n:
        x = jnp.pad(x, ((0, n_pad - n), (0, 0)))
    out = pl.pallas_call(
        _l2norm_rows_kernel,
        out_shape=jax.ShapeDtypeStruct((n_pad, c), out_dtype),
        grid=(n_pad // tm,),
        in_specs=[pl.BlockSpec((tm, c), lambda i: (i, 0))],
        out_specs=pl.BlockSpec((tm, c), lambda i: (i, 0)),
        compiler_params=pltpu.CompilerParams(
            dimension_semantics=("parallel",)),
    )(x)
    return out[:n]


def _run_l2norm_cmajor(feat_flat, *, out_dtype):
    B, c, hw = feat_flat.shape
    thw = hw if hw <= _HW_TILE else _HW_TILE
    out = pl.pallas_call(
        _l2norm_cmajor_kernel,
        out_shape=jax.ShapeDtypeStruct((B, c, hw), out_dtype),
        grid=(B, pl.cdiv(hw, thw)),
        in_specs=[pl.BlockSpec((None, c, thw), lambda b, j: (b, 0, j))],
        out_specs=pl.BlockSpec((None, c, thw), lambda b, j: (b, 0, j)),
        compiler_params=pltpu.CompilerParams(
            dimension_semantics=("parallel", "parallel")),
    )(feat_flat)
    return out


# ---------------------------------------------------------------------------
# Parameter init / one-time weight preparation
# ---------------------------------------------------------------------------
def init_mlp_params(feature_channels, nc, key, init_gain=0.02):
    """Deterministic 'normal' init (init_net): W ~ N(0, init_gain), b = 0.
    PyTorch Linear weight is (out, in); stored transposed as (in, out)."""
    params = []
    for feat_c in feature_channels:
        key, k1, k2 = jax.random.split(key, 3)
        w1 = (jax.random.normal(k1, (feat_c, nc)) * init_gain).astype(jnp.float32)
        b1 = jnp.zeros((1, nc), jnp.float32)
        w2 = (jax.random.normal(k2, (nc, nc)) * init_gain).astype(jnp.float32)
        b2 = jnp.zeros((1, nc), jnp.float32)
        params.append((w1, b1, w2, b2))
    return params


def _prepare_one(raw, compute_dtype=jnp.bfloat16):
    """Pad (exactly, with zeros) and cast one MLP's weights ONCE, in both
    row-major (sampled path) and channel-major (num_patches==0 path) forms."""
    w1, b1, w2, b2 = raw
    cin, nc = w1.shape
    cin_p = _round_up(cin, _LANE)
    ncp = _round_up(nc, _LANE)
    b1 = jnp.reshape(b1, (1, nc)).astype(jnp.float32)
    b2 = jnp.reshape(b2, (1, nc)).astype(jnp.float32)
    # Row-major: samples on sublanes, channels on lanes; Cin (K) zero-padded.
    w1_rm = jnp.pad(w1, ((0, cin_p - cin), (0, ncp - nc))).astype(compute_dtype)
    b1_rm = jnp.pad(b1, ((0, 0), (0, ncp - nc)))
    w2_rm = jnp.pad(w2, ((0, ncp - nc), (0, ncp - nc))).astype(compute_dtype)
    b2_rm = jnp.pad(b2, ((0, 0), (0, ncp - nc)))
    # Channel-major: channels on sublanes, spatial on lanes (y = W^T x + b).
    w1_cm = jnp.transpose(w1_rm[:cin, :])        # (NCp, Cin)
    b1_cm = jnp.transpose(b1_rm)                 # (NCp, 1)
    w2_cm = jnp.transpose(w2_rm)                 # (NCp, NCp)
    b2_cm = jnp.transpose(b2_rm)                 # (NCp, 1)
    return dict(nc=nc, cin=cin, cin_p=cin_p, ncp=ncp,
                rm=(w1_rm, b1_rm, w2_rm, b2_rm),
                cm=(w1_cm, b1_cm, w2_cm, b2_cm))


def prepare_mlp_params(raw_params, compute_dtype=jnp.bfloat16):
    return [_prepare_one(p, compute_dtype) for p in raw_params]


# ---------------------------------------------------------------------------
# Module-level forward
# ---------------------------------------------------------------------------
def patch_sample_f(feats, mlp_params=None, num_patches=64, patch_ids=None,
                   use_mlp=True, key=None,
                   compute_dtype=jnp.bfloat16, out_dtype=jnp.float32):
    """JAX/Pallas equivalent of PatchSampleF.forward.

    feats: list of NCHW arrays.  mlp_params: output of prepare_mlp_params
    (raw (w1,b1,w2,b2) tuples are also accepted and prepared on the fly).
    Returns (return_feats, return_ids).
    """
    return_ids, return_feats = [], []
    if key is None:
        key = jax.random.PRNGKey(0)
    for feat_id, feat in enumerate(feats):
        B, C, H, W = feat.shape
        feat_flat = feat.reshape(B, C, H * W)        # free reshape, stays NCHW

        prep = None
        if use_mlp:
            prep = mlp_params[feat_id]
            if not isinstance(prep, dict):           # raw tuple -> prepare once
                prep = _prepare_one(prep, compute_dtype)

        if num_patches > 0:
            if patch_ids is not None:
                # NOTE: jnp.take clamps out-of-range ids (XLA gather semantics).
                patch_id = jnp.asarray(patch_ids[feat_id], dtype=jnp.int32)
            else:
                key, sub = jax.random.split(key)
                perm = jax.random.permutation(sub, H * W)
                patch_id = perm[: int(min(num_patches, H * W))].astype(jnp.int32)
            # Gather BEFORE the channel transpose: pick P spatial positions
            # from the flattened HW axis (cheap), transpose only (B, C, P).
            # TODO(synk): optionally fuse this gather into the kernel via
            # PrefetchScalarGridSpec + pl.Element on the HW axis; kept in XLA
            # since the gathered tensor is tiny.
            picked = jnp.take(feat_flat, patch_id, axis=2)          # (B, C, P)
            x_sample = jnp.transpose(picked, (0, 2, 1)).reshape(
                B * patch_id.shape[0], C)
            if use_mlp:
                x_sample = _run_mlp_rows(x_sample, prep,
                                         compute_dtype=compute_dtype,
                                         out_dtype=out_dtype)
            else:
                x_sample = _run_l2norm_rows(x_sample, out_dtype=out_dtype)
        else:
            patch_id = jnp.zeros((0,), jnp.int32)
            # Full-map path: stay channel-major the whole way -> no
            # NCHW<->NHWC transposes and no full-tensor pads.
            if use_mlp:
                y = _run_mlp_cmajor(feat_flat, prep,
                                    compute_dtype=compute_dtype,
                                    out_dtype=out_dtype)
            else:
                y = _run_l2norm_cmajor(feat_flat, out_dtype=out_dtype)
            x_sample = y.reshape(B, y.shape[1], H, W)

        return_ids.append(patch_id)
        return_feats.append(x_sample)
    return return_feats, return_ids


# ---------------------------------------------------------------------------
# Pure-JAX (f32) reference for correctness checks
# ---------------------------------------------------------------------------
def _reference(feats, raw_params, patch_ids, use_mlp=True):
    outs = []
    for i, feat in enumerate(feats):
        B, C, H, W = feat.shape
        fr = jnp.transpose(feat, (0, 2, 3, 1)).reshape(B, H * W, C)
        fr = fr.astype(jnp.float32)
        pid = patch_ids[i]
        if pid.shape[0] > 0:
            xs = jnp.take(fr, pid, axis=1).reshape(B * pid.shape[0], C)
        else:
            xs = fr.reshape(B * H * W, C)
        if use_mlp:
            w1, b1, w2, b2 = raw_params[i]
            h = jnp.maximum(xs @ w1 + b1, 0.0)
            y = h @ w2 + b2
        else:
            y = xs
        norm = jnp.sqrt(jnp.sum(y * y, axis=-1, keepdims=True))
        y = y / (norm + EPS)
        if pid.shape[0] == 0:
            cp = y.shape[-1]
            y = jnp.transpose(y.reshape(B, H * W, cp), (0, 2, 1)).reshape(
                B, cp, H, W)
        outs.append(y)
    return outs


if __name__ == "__main__":
    key = jax.random.PRNGKey(0)
    k_feat, k_mlp, k_run = jax.random.split(key, 3)

    # Small shapes: B=2, C=4, H=W=16, nc=32, num_patches=8.
    B, C, H, W = 2, 4, 16, 16
    nc = 32
    num_patches = 8

    x = jax.random.normal(k_feat, (B, C, H, W), dtype=jnp.float32)
    feats = [x]
    raw_params = init_mlp_params([C], nc=nc, key=k_mlp, init_gain=0.02)
    prep_params = prepare_mlp_params(raw_params)      # pad/cast weights ONCE

    # --- sampled-patch path (num_patches > 0, use_mlp=True) ------------------
    out_feats, out_ids = patch_sample_f(
        feats, mlp_params=prep_params, num_patches=num_patches,
        use_mlp=True, key=k_run)
    out_feats = [jax.block_until_ready(f) for f in out_feats]
    ref = _reference(feats, raw_params, out_ids, use_mlp=True)
    for got, want in zip(out_feats, ref):
        assert got.shape == (B * num_patches, nc), got.shape
        # bf16 MXU inputs + approx reciprocal vs. pure-f32 reference.
        assert jnp.allclose(got, want, atol=2e-2, rtol=2e-2), \
            float(jnp.max(jnp.abs(got - want)))

    # --- full-map path (num_patches == 0): channel-major kernel, NCHW output -
    out_feats0, out_ids0 = patch_sample_f(
        feats, mlp_params=prep_params, num_patches=0, use_mlp=True, key=k_run)
    out_feats0 = [jax.block_until_ready(f) for f in out_feats0]
    ref0 = _reference(feats, raw_params, out_ids0, use_mlp=True)
    for got, want in zip(out_feats0, ref0):
        assert got.shape == (B, nc, H, W), got.shape
        assert jnp.allclose(got, want, atol=2e-2, rtol=2e-2), \
            float(jnp.max(jnp.abs(got - want)))

    # --- l2norm-only sampled path (use_mlp=False), exact f32 ------------------
    out_feats2, out_ids2 = patch_sample_f(
        feats, mlp_params=None, num_patches=num_patches,
        use_mlp=False, key=k_run)
    out_feats2 = [jax.block_until_ready(f) for f in out_feats2]
    ref2 = _reference(feats, None, out_ids2, use_mlp=False)
    for got, want in zip(out_feats2, ref2):
        assert got.shape == (B * num_patches, C), got.shape
        assert jnp.allclose(got, want, atol=1e-5, rtol=1e-5), \
            float(jnp.max(jnp.abs(got - want)))

    # --- l2norm-only full-map path (use_mlp=False, num_patches == 0) ----------
    out_feats3, out_ids3 = patch_sample_f(
        feats, mlp_params=None, num_patches=0, use_mlp=False, key=k_run)
    out_feats3 = [jax.block_until_ready(f) for f in out_feats3]
    ref3 = _reference(feats, None, out_ids3, use_mlp=False)
    for got, want in zip(out_feats3, ref3):
        assert got.shape == (B, C, H, W), got.shape
        assert jnp.allclose(got, want, atol=1e-5, rtol=1e-5), \
            float(jnp.max(jnp.abs(got - want)))

    print("KERNEL_OK")
</pallas_src>

<mosaic_0001>
module attributes {stable_mosaic.version = 11 : i64} {
  func.func @_mlp_l2norm_rows_kernel(%arg0: i32, %arg1: memref<8x128xbf16, #tpu.memory_space<vmem>>, %arg2: memref<128x128xbf16, #tpu.memory_space<vmem>>, %arg3: memref<1x128xf32, #tpu.memory_space<vmem>>, %arg4: memref<128x128xbf16, #tpu.memory_space<vmem>>, %arg5: memref<1x128xf32, #tpu.memory_space<vmem>>, %arg6: memref<8x128xf32, #tpu.memory_space<vmem>>) attributes {dimension_semantics = [#tpu.dimension_semantics<parallel>], iteration_bounds = array<i64: 2>, scalar_prefetch = 0 : i64, scratch_operands = 0 : i64, tpu.core_type = #tpu.core_type<tc>, window_params = [{transform_indices = @transform_0, window_bounds = array<i64: 8, 128>}, {pipeline_mode = #tpu.pipeline_mode<synchronous>, transform_indices = @transform_1, window_bounds = array<i64: 128, 128>}, {pipeline_mode = #tpu.pipeline_mode<synchronous>, transform_indices = @transform_2, window_bounds = array<i64: 1, 128>}, {pipeline_mode = #tpu.pipeline_mode<synchronous>, transform_indices = @transform_3, window_bounds = array<i64: 128, 128>}, {pipeline_mode = #tpu.pipeline_mode<synchronous>, transform_indices = @transform_4, window_bounds = array<i64: 1, 128>}, {transform_indices = @transform_5, window_bounds = array<i64: 8, 128>}]} {
    %c0 = arith.constant 0 : index
    %c0_0 = arith.constant 0 : index
    %0 = vector.load %arg1[%c0, %c0_0] : memref<8x128xbf16, #tpu.memory_space<vmem>>, vector<8x128xbf16>
    %c0_1 = arith.constant 0 : index
    %c0_2 = arith.constant 0 : index
    %1 = vector.load %arg2[%c0_1, %c0_2] : memref<128x128xbf16, #tpu.memory_space<vmem>>, vector<128x128xbf16>
    %cst = arith.constant dense<0.000000e+00> : vector<8x128xf32>
    %2 = tpu.matmul %0, %1, %cst {dimension_numbers = #tpu.dot_dimension_numbers<[1], [0], [0], [1], [0, 0, 1, 1], [], []>} : vector<8x128xbf16>, vector<128x128xbf16>, vector<8x128xf32> -> vector<8x128xf32>
    %c0_3 = arith.constant 0 : index
    %c0_4 = arith.constant 0 : index
    %3 = vector.load %arg3[%c0_3, %c0_4] : memref<1x128xf32, #tpu.memory_space<vmem>>, vector<1x128xf32>
    %4 = vector.broadcast %3 : vector<1x128xf32> to vector<8x128xf32>
    %5 = arith.addf %2, %4 : vector<8x128xf32>
    %cst_5 = arith.constant 0.000000e+00 : f32
    %6 = vector.broadcast %cst_5 : f32 to vector<8x128xf32>
    %7 = arith.maximumf %5, %6 : vector<8x128xf32>
    %8 = arith.truncf %7 : vector<8x128xf32> to vector<8x128xbf16>
    %c0_6 = arith.constant 0 : index
    %c0_7 = arith.constant 0 : index
    %9 = vector.load %arg4[%c0_6, %c0_7] : memref<128x128xbf16, #tpu.memory_space<vmem>>, vector<128x128xbf16>
    %cst_8 = arith.constant dense<0.000000e+00> : vector<8x128xf32>
    %10 = tpu.matmul %8, %9, %cst_8 {dimension_numbers = #tpu.dot_dimension_numbers<[1], [0], [0], [1], [0, 0, 1, 1], [], []>} : vector<8x128xbf16>, vector<128x128xbf16>, vector<8x128xf32> -> vector<8x128xf32>
    %c0_9 = arith.constant 0 : index
    %c0_10 = arith.constant 0 : index
    %11 = vector.load %arg5[%c0_9, %c0_10] : memref<1x128xf32, #tpu.memory_space<vmem>>, vector<1x128xf32>
    %12 = vector.broadcast %11 : vector<1x128xf32> to vector<8x128xf32>
    %13 = arith.addf %10, %12 : vector<8x128xf32>
    %14 = arith.mulf %13, %13 : vector<8x128xf32>
    %cst_11 = arith.constant dense<0.000000e+00> : vector<8xf32>
    %15 = vector.multi_reduction <add>, %14, %cst_11 [1] : vector<8x128xf32> to vector<8xf32>
    %16 = vector.shape_cast %15 : vector<8xf32> to vector<8x1xf32>
    %17 = math.sqrt %16 : vector<8x1xf32>
    %cst_12 = arith.constant 1.000000e-07 : f32
    %18 = vector.broadcast %cst_12 : f32 to vector<8x1xf32>
    %19 = arith.addf %17, %18 : vector<8x1xf32>
    %20 = tpu.reciprocal %19 {approx = true} : vector<8x1xf32> -> vector<8x1xf32>
    %21 = vector.broadcast %20 : vector<8x1xf32> to vector<8x128xf32>
    %22 = arith.mulf %13, %21 : vector<8x128xf32>
    %c0_13 = arith.constant 0 : index
    %c0_14 = arith.constant 0 : index
    %23 = vector.load %arg6[%c0_13, %c0_14] : memref<8x128xf32, #tpu.memory_space<vmem>>, vector<8x128xf32>
    tpu.vector_store %arg6[%c0_13, %c0_14], %22 {strides = array<i32>} : memref<8x128xf32, #tpu.memory_space<vmem>>, vector<8x128xf32>,
    return
  }
  func.func @transform_0(%arg0: i32) -> (i32, i32) {
    %c0_i32 = arith.constant 0 : i32
    %c0_i32_0 = arith.constant 0 : i32
    return %arg0, %c0_i32 : i32, i32
  }
  func.func @transform_1(%arg0: i32) -> (i32, i32) {
    %c0_i32 = arith.constant 0 : i32
    %c0_i32_0 = arith.constant 0 : i32
    %c0_i32_1 = arith.constant 0 : i32
    return %c0_i32, %c0_i32_0 : i32, i32
  }
  func.func @transform_2(%arg0: i32) -> (i32, i32) {
    %c0_i32 = arith.constant 0 : i32
    %c0_i32_0 = arith.constant 0 : i32
    %c0_i32_1 = arith.constant 0 : i32
    return %c0_i32, %c0_i32_0 : i32, i32
  }
  func.func @transform_3(%arg0: i32) -> (i32, i32) {
    %c0_i32 = arith.constant 0 : i32
    %c0_i32_0 = arith.constant 0 : i32
    %c0_i32_1 = arith.constant 0 : i32
    return %c0_i32, %c0_i32_0 : i32, i32
  }
  func.func @transform_4(%arg0: i32) -> (i32, i32) {
    %c0_i32 = arith.constant 0 : i32
    %c0_i32_0 = arith.constant 0 : i32
    %c0_i32_1 = arith.constant 0 : i32
    return %c0_i32, %c0_i32_0 : i32, i32
  }
  func.func @transform_5(%arg0: i32) -> (i32, i32) {
    %c0_i32 = arith.constant 0 : i32
    %c0_i32_0 = arith.constant 0 : i32
    return %arg0, %c0_i32 : i32, i32
  }
}

</mosaic_0001>

<llo_original>
// kernel: tpu_custom_call.1
$region0: #{tpu_custom_call.1}
  #allocation0 [shape = 'u32[]', space=smem, size = 0x4, offset = 0x4, fixed_abs, tag = 'smem constant byte address 0x4 - core index']
  #allocation1 [shape = 'u32[144,128]{1,0:T(1,128)}', space=vmem, size = 0x12000, scoped, tag = 'internal scratch']
  %s0 = inlined_call_operand.hbm [shape: bf16[16,128], index: 0, kind: input, shape index: {}]
  %s1 = inlined_call_operand.hbm [shape: bf16[128,128], index: 1, kind: input, shape index: {}]
  %s2 = inlined_call_operand.vmem [shape: f32[1,128], index: 2, kind: input, shape index: {}]
  %s3 = inlined_call_operand.hbm [shape: bf16[128,128], index: 3, kind: input, shape index: {}]
  %s4 = inlined_call_operand.vmem [shape: f32[1,128], index: 4, kind: input, shape index: {}]
  %s5 = inlined_call_operand.hbm [shape: f32[16,128], index: 5, kind: output, shape index: {}]
  %s6 = sld [smem:[#allocation0]]
  $region65: #{tpu_custom_call.1} parent=0
    _
  %s8 = ssub.s32 1, %s6
  %s9 = scalar_select 0, %s8, %s6
  $region1: #{tpu_custom_call.1} parent=0
    #allocation2 [shape = 'u8[4096]{0}', space=vmem, size = 0x1000, scoped, tag = 'input window, operand 0']
    #allocation3 [shape = 's32[2]{0}', space=sflag, size = 0x8, scoped, tag = 'scoped memory for tpu_custom_call.1']
    #allocation4 [shape = 's32[2]{0}', space=sflag, size = 0x8, scoped, tag = 'scoped memory for tpu_custom_call.1']
    #allocation5 [shape = 'u8[32768]{0}', space=vmem, size = 0x8000, scoped, tag = 'input window, operand 1, single buffered']
    #allocation6 [shape = 's32[1]{0}', space=sflag, size = 0x4, scoped, tag = 'scoped memory for tpu_custom_call.1']
    #allocation7 [shape = 'u8[32768]{0}', space=vmem, size = 0x8000, scoped, tag = 'input window, operand 3, single buffered']
    #allocation8 [shape = 'u8[8192]{0}', space=vmem, size = 0x2000, scoped, tag = 'output window, operand 0']
    %10 = vsyncpa [#allocation3], 0
    %s11 = scalar_lea.sflag [#allocation3], 1
    %12 = vsyncpa %s11, 0
    %13 = vsyncpa [#allocation6], 0
    %14 = vsyncpa [#allocation4], 0
    %s15 = scalar_lea.sflag [#allocation4], 1
    %16 = vsyncpa %s15, 0
    loop: start=0, step=1, limit=4
    $region2: #{tpu_custom_call.1} parent=1 // loop_pre_header
      _
    $region3: #{tpu_custom_call.1} parent=1 // loop_header
      %s18 = sphi 0, %s22
      %p19 = scmp.ge.s32.totalorder %s18, 4
      %s28 = sphi 0, %s30
      %s31 = sphi 0, %s28
      %s32 = sphi 0, %s31
      %s48 = sphi 0, %s32
      %s52 = sphi 0, %s52
      %s54 = sphi 0, %s52
      %s55 = sphi 0, %s54
      %s69 = sphi 0, %s55
      %s73 = sphi 0, %s73
      %s75 = sphi 0, %s73
      %s76 = sphi 0, %s75
      %s90 = sphi 0, %s76
      %s94 = sphi 0, %s94
      %s96 = sphi 0, %s94
      %s97 = sphi 0, %s96
      %s111 = sphi 0, %s97
      %s115 = sphi 0, %s115
      %s117 = sphi 0, %s115
      %s118 = sphi 0, %s117
      %s132 = sphi 0, %s118
      %s138 = sphi 0, %s140
      %s141 = sphi 0, %s138
      %s142 = sphi 0, %s141
      %s158 = sphi 0, %s142
    $region4: #{tpu_custom_call.1} parent=1 // loop_header_branch
      %21 = sbr.rel (%p19) target = $region8
    $region5: #{tpu_custom_call.1} parent=1 // loop_body
      %s23 = ssub.s32 %s18, 1
      %s24 = ssub.s32 %s18, 2
      %s25 = sadd.s32 %s18, 1
      %s26 = ssub.s32 %s18, %s25
      %p27 = scmp.eq.s32.totalorder %s26, 0
      %s29 = sadd.s32 %s28, 1
      %s30 = scalar_select %p27, %s28, %s29
      %p33 = pneg %p27
      %p34 = scmp.eq.s32.totalorder %s18, 1
      %p35 = por %p33, %p34
      %p36 = scmp.ne.s32.totalorder %s28, %s31
      %p37 = scmp.eq.s32.totalorder %s18, 0
      %p38 = por %p36, %p37
      %p39 = scmp.ne.s32.totalorder %s28, %s31
      %p40 = scmp.eq.s32.totalorder %s23, 1
      %p41 = por %p39, %p40
      %p42 = scmp.ne.s32.totalorder %s31, %s32
      %p43 = scmp.eq.s32.totalorder %s23, 0
      %p44 = por %p42, %p43
      %p45 = scmp.ne.s32.totalorder %s31, %s32
      %p46 = scmp.eq.s32.totalorder %s24, 1
      %p47 = por %p45, %p46
      %p49 = scmp.ne.s32.totalorder %s32, %s48
      %p50 = scmp.eq.s32.totalorder %s24, 0
      %p51 = por %p49, %p50
      %s53 = sadd.s32 %s52, 1
      %p56 = scmp.eq.s32.totalorder %s18, 1
      %p57 = scmp.ne.s32.totalorder %s52, %s54
      %p58 = scmp.eq.s32.totalorder %s18, 0
      %p59 = por %p57, %p58
      %p60 = scmp.ne.s32.totalorder %s52, %s54
      %p61 = scmp.eq.s32.totalorder %s23, 1
      %p62 = por %p60, %p61
      %p63 = scmp.ne.s32.totalorder %s54, %s55
      %p64 = scmp.eq.s32.totalorder %s23, 0
      %p65 = por %p63, %p64
      %p66 = scmp.ne.s32.totalorder %s54, %s55
      %p67 = scmp.eq.s32.totalorder %s24, 1
      %p68 = por %p66, %p67
      %p70 = scmp.ne.s32.totalorder %s55, %s69
      %p71 = scmp.eq.s32.totalorder %s24, 0
      %p72 = por %p70, %p71
      %s74 = sadd.s32 %s73, 1
      %p77 = scmp.eq.s32.totalorder %s18, 1
      %p78 = scmp.ne.s32.totalorder %s73, %s75
      %p79 = scmp.eq.s32.totalorder %s18, 0
      %p80 = por %p78, %p79
      %p81 = scmp.ne.s32.totalorder %s73, %s75
      %p82 = scmp.eq.s32.totalorder %s23, 1
      %p83 = por %p81, %p82
      %p84 = scmp.ne.s32.totalorder %s75, %s76
      %p85 = scmp.eq.s32.totalorder %s23, 0
      %p86 = por %p84, %p85
      %p87 = scmp.ne.s32.totalorder %s75, %s76
      %p88 = scmp.eq.s32.totalorder %s24, 1
      %p89 = por %p87, %p88
      %p91 = scmp.ne.s32.totalorder %s76, %s90
      %p92 = scmp.eq.s32.totalorder %s24, 0
      %p93 = por %p91, %p92
      %s95 = sadd.s32 %s94, 1
      %p98 = scmp.eq.s32.totalorder %s18, 1
      %p99 = scmp.ne.s32.totalorder %s94, %s96
      %p100 = scmp.eq.s32.totalorder %s18, 0
      %p101 = por %p99, %p100
      %p102 = scmp.ne.s32.totalorder %s94, %s96
      %p103 = scmp.eq.s32.totalorder %s23, 1
      %p104 = por %p102, %p103
      %p105 = scmp.ne.s32.totalorder %s96, %s97
      %p106 = scmp.eq.s32.totalorder %s23, 0
      %p107 = por %p105, %p106
      %p108 = scmp.ne.s32.totalorder %s96, %s97
      %p109 = scmp.eq.s32.totalorder %s24, 1
      %p110 = por %p108, %p109
      %p112 = scmp.ne.s32.totalorder %s97, %s111
      %p113 = scmp.eq.s32.totalorder %s24, 0
      %p114 = por %p112, %p113
      %s116 = sadd.s32 %s115, 1
      %p119 = scmp.eq.s32.totalorder %s18, 1
      %p120 = scmp.ne.s32.totalorder %s115, %s117
      %p121 = scmp.eq.s32.totalorder %s18, 0
      %p122 = por %p120, %p121
      %p123 = scmp.ne.s32.totalorder %s115, %s117
      %p124 = scmp.eq.s32.totalorder %s23, 1
      %p125 = por %p123, %p124
      %p126 = scmp.ne.s32.totalorder %s117, %s118
      %p127 = scmp.eq.s32.totalorder %s23, 0
      %p128 = por %p126, %p127
      %p129 = scmp.ne.s32.totalorder %s117, %s118
      %p130 = scmp.eq.s32.totalorder %s24, 1
      %p131 = por %p129, %p130
      %p133 = scmp.ne.s32.totalorder %s118, %s132
      %p134 = scmp.eq.s32.totalorder %s24, 0
      %p135 = por %p133, %p134
      %s136 = ssub.s32 %s18, %s25
      %p137 = scmp.eq.s32.totalorder %s136, 0
      %s139 = sadd.s32 %s138, 1
      %s140 = scalar_select %p137, %s138, %s139
      %p143 = pneg %p137
      %p144 = scmp.eq.s32.totalorder %s18, 1
      %p145 = por %p143, %p144
      %p146 = scmp.ne.s32.totalorder %s138, %s141
      %p147 = scmp.eq.s32.totalorder %s18, 0
      %p148 = por %p146, %p147
      %p149 = scmp.ne.s32.totalorder %s138, %s141
      %p150 = scmp.eq.s32.totalorder %s23, 1
      %p151 = por %p149, %p150
      %p152 = scmp.ne.s32.totalorder %s141, %s142
      %p153 = scmp.eq.s32.totalorder %s23, 0
      %p154 = por %p152, %p153
      %p155 = scmp.ne.s32.totalorder %s141, %s142
      %p156 = scmp.eq.s32.totalorder %s24, 1
      %p157 = por %p155, %p156
      %p159 = scmp.ne.s32.totalorder %s142, %s158
      %p160 = scmp.eq.s32.totalorder %s24, 0
      %p161 = por %p159, %p160
      %p162 = scmp.le.s32.totalorder 1, %s18
      %p163 = scmp.lt.s32.totalorder %s18, 3
      %p164 = pnand %p162, %p163
      %p165 = pneg %p164
      // Predicated region
      $region9: #{tpu_custom_call.1} parent=5 // pred_check
        _
      $region10: #{tpu_custom_call.1} parent=5 // pred_check_branch
        %167 = sbr.rel (%p164) target = $region12
      $region11: #{tpu_custom_call.1} parent=5 // pred_region
        %s168 = ssub.s32 %s18, 1
        // Predicated region
        $region13: #{tpu_custom_call.1} parent=11 // pred_check
          %p169 = pneg %p65
        $region14: #{tpu_custom_call.1} parent=11 // pred_check_branch
          %171 = sbr.rel (%p169) target = $region16
        $region15: #{tpu_custom_call.1} parent=11 // pred_region
          %s173 = ssub.s32 1024, 1024
          %174 = vsyncadd [#allocation6], %s173
          %s175 = sshll.u32 [#allocation5], 4
          %s176 = int_to_ptr.vmem [resolvable:$true] %s175
          %181 = dma.hbm_to_vmem [thread:$0]  %s1, 1024, %s176, [#allocation6], 64, 64, 4
        $region16: #{tpu_custom_call.1} parent=11 // pred_fallthru
          _
        // Predicated region
        $region17: #{tpu_custom_call.1} parent=11 // pred_check
          %p182 = pneg %p86
        $region18: #{tpu_custom_call.1} parent=11 // pred_check_branch
          %184 = sbr.rel (%p182) target = $region20
        $region19: #{tpu_custom_call.1} parent=11 // pred_region
          _
        $region20: #{tpu_custom_call.1} parent=11 // pred_fallthru
          _
        // Predicated region
        $region21: #{tpu_custom_call.1} parent=11 // pred_check
          %p185 = pneg %p107
        $region22: #{tpu_custom_call.1} parent=11 // pred_check_branch
          %187 = sbr.rel (%p185) target = $region24
        $region23: #{tpu_custom_call.1} parent=11 // pred_region
          %s189 = ssub.s32 1024, 1024
          %190 = vsyncadd [#allocation6], %s189
          %s191 = sshll.u32 [#allocation7], 4
          %s192 = int_to_ptr.vmem [resolvable:$true] %s191
          %197 = dma.hbm_to_vmem [thread:$0]  %s3, 1024, %s192, [#allocation6], 64, 64, 4
        $region24: #{tpu_custom_call.1} parent=11 // pred_fallthru
          _
        // Predicated region
        $region25: #{tpu_custom_call.1} parent=11 // pred_check
          %p198 = pneg %p128
        $region26: #{tpu_custom_call.1} parent=11 // pred_check_branch
          %200 = sbr.rel (%p198) target = $region28
        $region27: #{tpu_custom_call.1} parent=11 // pred_region
          _
        $region28: #{tpu_custom_call.1} parent=11 // pred_fallthru
          _
      $region12: #{tpu_custom_call.1} parent=5 // pred_fallthru
        _
      %p201 = scmp.lt.s32.totalorder %s18, 2
      // Predicated region
      $region29: #{tpu_custom_call.1} parent=5 // pred_check
        %p202 = pneg %p201
      $region30: #{tpu_custom_call.1} parent=5 // pred_check_branch
        %204 = sbr.rel (%p202) target = $region32
      $region31: #{tpu_custom_call.1} parent=5 // pred_region
        // Predicated region
        $region33: #{tpu_custom_call.1} parent=31 // pred_check
          %p205 = pneg %p38
        $region34: #{tpu_custom_call.1} parent=31 // pred_check_branch
          %207 = sbr.rel (%p205) target = $region36
        $region35: #{tpu_custom_call.1} parent=31 // pred_region
          %s208 = sand.u32 %s28, 1
          %s209 = scalar_lea.sflag [#allocation3], %s208
          %s210 = sand.u32 %s28, 1
          %s211 = smul.addr %s210, 4
          %s212 = scalar_lea.vmem [#allocation2], %s211
          %s214 = ssub.s32 64, 64
          %215 = vsyncadd %s209, %s214
          %s216 = smul.addr %s18, 64
          %s217 = scalar_lea.hbm %s0, %s216
          %s219 = sshll.u32 %s212, 4
          %s220 = int_to_ptr.vmem [resolvable:$true] %s219
          %222 = dma.hbm_to_vmem [thread:$0]  %s217, 64, %s220, %s209
        $region36: #{tpu_custom_call.1} parent=31 // pred_fallthru
          _
      $region32: #{tpu_custom_call.1} parent=5 // pred_fallthru
        _
      %p223 = scmp.le.s32.totalorder 1, %s18
      %p224 = scmp.lt.s32.totalorder %s18, 3
      %p225 = pnand %p223, %p224
      %p226 = pneg %p225
      // Predicated region
      $region37: #{tpu_custom_call.1} parent=5 // pred_check
        _
      $region38: #{tpu_custom_call.1} parent=5 // pred_check_branch
        %228 = sbr.rel (%p225) target = $region40
      $region39: #{tpu_custom_call.1} parent=5 // pred_region
        %s229 = ssub.s32 %s18, 1
        %s230 = sand.u32 %s31, 1
        %s231 = scalar_lea.sflag [#allocation3], %s230
        %s232 = sand.u32 %s31, 1
        %s233 = smul.addr %s232, 4
        %s234 = scalar_lea.vmem [#allocation2], %s233
        // Predicated region
        $region41: #{tpu_custom_call.1} parent=39 // pred_check
          %p235 = pneg %p44
        $region42: #{tpu_custom_call.1} parent=39 // pred_check_branch
          %237 = sbr.rel (%p235) target = $region44
        $region43: #{tpu_custom_call.1} parent=39 // pred_region
          %238 = dma.done %s231, 64
        $region44: #{tpu_custom_call.1} parent=39 // pred_fallthru
          _
        // Predicated region
        $region45: #{tpu_custom_call.1} parent=39 // pred_check
          %p239 = pneg %p65
        $region46: #{tpu_custom_call.1} parent=39 // pred_check_branch
          %241 = sbr.rel (%p239) target = $region48
        $region47: #{tpu_custom_call.1} parent=39 // pred_region
          %242 = dma.done [#allocation6], 1024
        $region48: #{tpu_custom_call.1} parent=39 // pred_fallthru
          _
        // Predicated region
        $region49: #{tpu_custom_call.1} parent=39 // pred_check
          %p243 = pneg %p107
        $region50: #{tpu_custom_call.1} parent=39 // pred_check_branch
          %245 = sbr.rel (%p243) target = $region52
        $region51: #{tpu_custom_call.1} parent=39 // pred_region
          %246 = dma.done [#allocation6], 1024
        $region52: #{tpu_custom_call.1} parent=39 // pred_fallthru
          _
        %s247 = sand.u32 %s31, 1
        %s248 = scalar_lea.sflag [#allocation3], %s247
        %s249 = sand.u32 %s31, 1
        %s250 = smul.addr %s249, 4
        %s251 = scalar_lea.vmem [#allocation2], %s250
        %p252 = pneg %p44
        %p253 = pneg %p41
        %p254 = pneg %p65
        %p255 = pneg %p62
        %p256 = pneg %p86
        %p257 = pneg %p83
        %p258 = pneg %p107
        %p259 = pneg %p104
        %p260 = pneg %p128
        %p261 = pneg %p125
        %p262 = pneg %p154
        %p263 = pneg %p151
        %s264 = sand.u32 %s141, 1
        %s265 = scalar_lea.sflag [#allocation4], %s264
        %s266 = sand.u32 %s141, 1
        %s267 = smul.addr %s266, 8
        %s268 = scalar_lea.vmem [#allocation8], %s267
        %v270 = vld [vmem:[%s234] sm:$0xf]
        %v271 = vld [vmem:[#allocation5] sm:$0xf]
        %v272 = vld [vmem:[#allocation5 + $0x4] sm:$0xf]
        %v273 = vld [vmem:[#allocation5 + $0x8] sm:$0xf]
        %v274 = vld [vmem:[#allocation5 + $0xc] sm:$0xf]
        %v275 = vld [vmem:[#allocation5 + $0x10] sm:$0xf]
        %v276 = vld [vmem:[#allocation5 + $0x14] sm:$0xf]
        %v277 = vld [vmem:[#allocation5 + $0x18] sm:$0xf]
        %v278 = vld [vmem:[#allocation5 + $0x1c] sm:$0xf]
        %v279 = vld [vmem:[#allocation5 + $0x20] sm:$0xf]
        %v280 = vld [vmem:[#allocation5 + $0x24] sm:$0xf]
        %v281 = vld [vmem:[#allocation5 + $0x28] sm:$0xf]
        %v282 = vld [vmem:[#allocation5 + $0x2c] sm:$0xf]
        %v283 = vld [vmem:[#allocation5 + $0x30] sm:$0xf]
        %v284 = vld [vmem:[#allocation5 + $0x34] sm:$0xf]
        %v285 = vld [vmem:[#allocation5 + $0x38] sm:$0xf]
        %v286 = vld [vmem:[#allocation5 + $0x3c] sm:$0xf]
        %v287 = vld [vmem:[%s2] sm:$0x1]
        %v289 = vlaneseq
        %v290 = vshrl.u32 %v289, 7
        %v291 = vsub.s32 0, %v290
        %v292 = vrot.slane %v287, %v291
        %v310 = vunpack.c.l.b16 %v271
        %v311 = vunpack.c.l.b16 %v272
        %v312 = vunpack.c.l.b16 %v273
        %v313 = vunpack.c.l.b16 %v274
        %v314 = vunpack.c.l.b16 %v275
        %v315 = vunpack.c.l.b16 %v276
        %v316 = vunpack.c.l.b16 %v277
        %v317 = vunpack.c.l.b16 %v278
        %v318 = vunpack.c.l.b16 %v279
        %v319 = vunpack.c.l.b16 %v280
        %v320 = vunpack.c.l.b16 %v281
        %v321 = vunpack.c.l.b16 %v282
        %v322 = vunpack.c.l.b16 %v283
        %v323 = vunpack.c.l.b16 %v284
        %v324 = vunpack.c.l.b16 %v285
        %v325 = vunpack.c.l.b16 %v286
        %v326 = vpack.c.b16 %v311, %v310
        %v327 = vpack.c.b16 %v313, %v312
        %v328 = vpack.c.b16 %v315, %v314
        %v329 = vpack.c.b16 %v317, %v316
        %v330 = vpack.c.b16 %v319, %v318
        %v331 = vpack.c.b16 %v321, %v320
        %v332 = vpack.c.b16 %v323, %v322
        %v333 = vpack.c.b16 %v325, %v324
        %342 = vmatprep.subr.bf16.mxu0 0
        %343 = vmatpush1.bf16.msra.mxu0 %v326
        %344 = vmatprep.subr.bf16.mxu0 0
        %345 = vmatpush1.bf16.msra.mxu0 %v327
        %346 = vmatprep.subr.bf16.mxu0 0
        %347 = vmatpush1.bf16.msra.mxu0 %v328
        %348 = vmatprep.subr.bf16.mxu0 0
        %349 = vmatpush1.bf16.msra.mxu0 %v329
        %350 = vmatprep.subr.bf16.mxu0 0
        %351 = vmatpush1.bf16.msra.mxu0 %v330
        %352 = vmatprep.subr.bf16.mxu0 0
        %353 = vmatpush1.bf16.msra.mxu0 %v331
        %354 = vmatprep.subr.bf16.mxu0 0
        %355 = vmatpush1.bf16.msra.mxu0 %v332
        %356 = vmatprep.subr.bf16.mxu0 0
        %357 = vmatpush1.bf16.msra.mxu0 %v333
        %358 = vmatprep.subr.bf16.mxu0 0
        %359 = vmatpush1.bf16.msra.mxu0 0
        %360 = vmatprep.subr.bf16.mxu0 0
        %361 = vmatpush1.bf16.msra.mxu0 0
        %362 = vmatprep.subr.bf16.mxu0 0
        %363 = vmatpush1.bf16.msra.mxu0 0
        %364 = vmatprep.subr.bf16.mxu0 0
        %365 = vmatpush1.bf16.msra.mxu0 0
        %366 = vmatprep.subr.bf16.mxu0 0
        %367 = vmatpush1.bf16.msra.mxu0 0
        %368 = vmatprep.subr.bf16.mxu0 0
        %369 = vmatpush1.bf16.msra.mxu0 0
        %370 = vmatprep.subr.bf16.mxu0 0
        %371 = vmatpush1.bf16.msra.mxu0 0
        %372 = vmatprep.subr.bf16.mxu0 0
        %373 = vmatpush1.bf16.msra.mxu0 0
        %374 = vmatprep.mubr.bf16.mxu0 0
        %375 = vmatmul.mubr.bf16.gmra.mrb[0].mxu0 %v270
        %v376 = vpop.f32.mrb[0].mxu0
        %v377 = vadd.f32 %v292, %v376
        %v378 = vpop.f32.mrb[0].mxu0
        %v379 = vpop.f32.mrb[0].mxu0
        %v380 = vpop.f32.mrb[0].mxu0
        %381 = vdwg.mxu0
        %v382 = vmax.f32 %v377, 0.0
        %v383 = vpack.c.bf16 %v382, %v382
        %v384 = vld [vmem:[#allocation7] sm:$0xf]
        %v385 = vld [vmem:[#allocation7 + $0x4] sm:$0xf]
        %v386 = vld [vmem:[#allocation7 + $0x8] sm:$0xf]
        %v387 = vld [vmem:[#allocation7 + $0xc] sm:$0xf]
        %v388 = vld [vmem:[#allocation7 + $0x10] sm:$0xf]
        %v389 = vld [vmem:[#allocation7 + $0x14] sm:$0xf]
        %v390 = vld [vmem:[#allocation7 + $0x18] sm:$0xf]
        %v391 = vld [vmem:[#allocation7 + $0x1c] sm:$0xf]
        %v392 = vld [vmem:[#allocation7 + $0x20] sm:$0xf]
        %v393 = vld [vmem:[#allocation7 + $0x24] sm:$0xf]
        %v394 = vld [vmem:[#allocation7 + $0x28] sm:$0xf]
        %v395 = vld [vmem:[#allocation7 + $0x2c] sm:$0xf]
        %v396 = vld [vmem:[#allocation7 + $0x30] sm:$0xf]
        %v397 = vld [vmem:[#allocation7 + $0x34] sm:$0xf]
        %v398 = vld [vmem:[#allocation7 + $0x38] sm:$0xf]
        %v399 = vld [vmem:[#allocation7 + $0x3c] sm:$0xf]
        %v400 = vld [vmem:[%s4] sm:$0x1]
        %v402 = vlaneseq
        %v403 = vshrl.u32 %v402, 7
        %v404 = vsub.s32 0, %v403
        %v405 = vrot.slane %v400, %v404
        %v423 = vunpack.c.l.b16 %v384
        %v424 = vunpack.c.l.b16 %v385
        %v425 = vunpack.c.l.b16 %v386
        %v426 = vunpack.c.l.b16 %v387
        %v427 = vunpack.c.l.b16 %v388
        %v428 = vunpack.c.l.b16 %v389
        %v429 = vunpack.c.l.b16 %v390
        %v430 = vunpack.c.l.b16 %v391
        %v431 = vunpack.c.l.b16 %v392
        %v432 = vunpack.c.l.b16 %v393
        %v433 = vunpack.c.l.b16 %v394
        %v434 = vunpack.c.l.b16 %v395
        %v435 = vunpack.c.l.b16 %v396
        %v436 = vunpack.c.l.b16 %v397
        %v437 = vunpack.c.l.b16 %v398
        %v438 = vunpack.c.l.b16 %v399
        %v439 = vpack.c.b16 %v424, %v423
        %v440 = vpack.c.b16 %v426, %v425
        %v441 = vpack.c.b16 %v428, %v427
        %v442 = vpack.c.b16 %v430, %v429
        %v443 = vpack.c.b16 %v432, %v431
        %v444 = vpack.c.b16 %v434, %v433
        %v445 = vpack.c.b16 %v436, %v435
        %v446 = vpack.c.b16 %v438, %v437
        %455 = vmatprep.subr.bf16.mxu0 0
        %456 = vmatpush1.bf16.msra.mxu0 %v439
        %457 = vmatprep.subr.bf16.mxu0 0
        %458 = vmatpush1.bf16.msra.mxu0 %v440
        %459 = vmatprep.subr.bf16.mxu0 0
        %460 = vmatpush1.bf16.msra.mxu0 %v441
        %461 = vmatprep.subr.bf16.mxu0 0
        %462 = vmatpush1.bf16.msra.mxu0 %v442
        %463 = vmatprep.subr.bf16.mxu0 0
        %464 = vmatpush1.bf16.msra.mxu0 %v443
        %465 = vmatprep.subr.bf16.mxu0 0
        %466 = vmatpush1.bf16.msra.mxu0 %v444
        %467 = vmatprep.subr.bf16.mxu0 0
        %468 = vmatpush1.bf16.msra.mxu0 %v445
        %469 = vmatprep.subr.bf16.mxu0 0
        %470 = vmatpush1.bf16.msra.mxu0 %v446
        %471 = vmatprep.subr.bf16.mxu0 0
        %472 = vmatpush1.bf16.msra.mxu0 0
        %473 = vmatprep.subr.bf16.mxu0 0
        %474 = vmatpush1.bf16.msra.mxu0 0
        %475 = vmatprep.subr.bf16.mxu0 0
        %476 = vmatpush1.bf16.msra.mxu0 0
        %477 = vmatprep.subr.bf16.mxu0 0
        %478 = vmatpush1.bf16.msra.mxu0 0
        %479 = vmatprep.subr.bf16.mxu0 0
        %480 = vmatpush1.bf16.msra.mxu0 0
        %481 = vmatprep.subr.bf16.mxu0 0
        %482 = vmatpush1.bf16.msra.mxu0 0
        %483 = vmatprep.subr.bf16.mxu0 0
        %484 = vmatpush1.bf16.msra.mxu0 0
        %485 = vmatprep.subr.bf16.mxu0 0
        %486 = vmatpush1.bf16.msra.mxu0 0
        %487 = vmatprep.mubr.bf16.mxu0 0
        %488 = vmatmul.mubr.bf16.gmra.mrb[0].mxu0 %v383
        %v489 = vpop.f32.mrb[0].mxu0
        %v490 = vadd.f32 %v405, %v489
        %v491 = vpop.f32.mrb[0].mxu0
        %v492 = vpop.f32.mrb[0].mxu0
        %v493 = vpop.f32.mrb[0].mxu0
        %494 = vdwg.mxu0
        %v495 = vmul.f32 %v490, %v490
        %496 = vadd.xlane.f32.xlu0 %v495
        %v497 = vpop.xlane.xlu0 %496
        %v498 = vrsqrt.pop %v497
        %v499 = vmul.f32 %v497, %v498
        %vm500 = vcmp.eq.f32.partialorder %v497, inf
        %v501 = vsel %vm500, %v497, %v499
        %vm502 = vcmp.eq.f32.partialorder %v497, 0.0
        %v503 = vand.u32 %v497, 2147483648
        %v504 = vsel %vm502, %v503, %v501
        %v505 = vadd.f32 %v504, 1e-07
        %v506 = vrcp.pop %v505
        %v507 = vmul.f32 %v490, %v506
        %508 = vst [vmem:[%s268] sm:$0xff] %v507
        %s509 = sand.u32 %s141, 1
        %s510 = scalar_lea.sflag [#allocation4], %s509
        %s511 = sand.u32 %s141, 1
        %s512 = smul.addr %s511, 8
        %s513 = scalar_lea.vmem [#allocation8], %s512
        // Predicated region
        $region53: #{tpu_custom_call.1} parent=39 // pred_check
          %p514 = pneg %p151
        $region54: #{tpu_custom_call.1} parent=39 // pred_check_branch
          %516 = sbr.rel (%p514) target = $region56
        $region55: #{tpu_custom_call.1} parent=39 // pred_region
          %s518 = ssub.s32 128, 128
          %519 = vsyncadd %s510, %s518
          %s520 = smul.addr %s23, 128
          %s521 = scalar_lea.hbm %s5, %s520
          %s523 = sshll.u32 %s513, 4
          %s524 = int_to_ptr.vmem [resolvable:$true] %s523
          %526 = dma.vmem_to_hbm [thread:$0]  %s524, 128, %s521, %s510
        $region56: #{tpu_custom_call.1} parent=39 // pred_fallthru
          _
      $region40: #{tpu_custom_call.1} parent=5 // pred_fallthru
        _
      %p527 = scmp.le.s32.totalorder 2, %s18
      // Predicated region
      $region57: #{tpu_custom_call.1} parent=5 // pred_check
        %p528 = pneg %p527
      $region58: #{tpu_custom_call.1} parent=5 // pred_check_branch
        %530 = sbr.rel (%p528) target = $region60
      $region59: #{tpu_custom_call.1} parent=5 // pred_region
        %s531 = ssub.s32 %s18, 2
        // Predicated region
        $region61: #{tpu_custom_call.1} parent=59 // pred_check
          %p532 = pneg %p157
        $region62: #{tpu_custom_call.1} parent=59 // pred_check_branch
          %534 = sbr.rel (%p532) target = $region64
        $region63: #{tpu_custom_call.1} parent=59 // pred_region
          %s535 = sand.u32 %s142, 1
          %s536 = scalar_lea.sflag [#allocation4], %s535
          %s537 = sand.u32 %s142, 1
          %s538 = smul.addr %s537, 8
          %s539 = scalar_lea.vmem [#allocation8], %s538
          %540 = dma.done %s536, 128
        $region64: #{tpu_custom_call.1} parent=59 // pred_fallthru
          _
      $region60: #{tpu_custom_call.1} parent=5 // pred_fallthru
        _
    $region6: #{tpu_custom_call.1} parent=1 // loop_footer
      %s22 = sadd.s32 1, %s18
    $region7: #{tpu_custom_call.1} parent=1 // loop_footer_branch
      %17 = sbr.rel target = $region3
    $region8: #{tpu_custom_call.1} parent=1 // loop_exit
      _
    %541 = vsyncpa [#allocation3], 1
    %s542 = scalar_lea.sflag [#allocation3], 1
    %543 = vsyncpa %s542, 1
    %544 = vsyncpa [#allocation6], 1
    %545 = vsyncpa [#allocation4], 1
    %s546 = scalar_lea.sflag [#allocation4], 1
    %547 = vsyncpa %s546, 1

</llo_original>
